<compile_context>
chip_gen: v7x
topology: tpu7x:2x2x1
jax: 0.10.0
libtpu: 0.0.40
codegen_flags: <defaults>
</compile_context>

<pallas_src>
import functools
import math

import jax
import jax.numpy as jnp
from jax.experimental import pallas as pl
from jax.experimental.pallas import tpu as pltpu


# ----------------------------------------------------------------------------
# Generation-dependent configuration
# ----------------------------------------------------------------------------
def _rup(x, m):
    return (x + m - 1) // m * m


def _tpu_config():
    """Max matmul M/N tile and a VMEM limit hint that also fits v7x (64 MiB)."""
    kind = ""
    try:
        kind = jax.devices()[0].device_kind.lower()
    except Exception:
        pass
    # v5e (and older) MXUs are 128-wide; v6e / v7x are 256-wide.
    max_mn = 128 if any(t in kind for t in ("v2", "v3", "v4", "v5")) else 256
    vmem_limit = 48 * 1024 * 1024 if "v7" in kind else 96 * 1024 * 1024
    try:
        cap = int(pltpu.get_tpu_info().vmem_capacity_bytes)
        vmem_limit = min(vmem_limit, max(cap * 3 // 4, 16 * 1024 * 1024))
    except Exception:
        pass
    return max_mn, vmem_limit


_MAX_MN, _VMEM_LIMIT = _tpu_config()
_CDT = jnp.bfloat16  # activation / weight compute dtype (MXU-native)


# ----------------------------------------------------------------------------
# Tile selection helpers (adaptive: no padding to 128 for tiny M, no K waste)
# ----------------------------------------------------------------------------
def _pick_m(M, cap):
    Mp = _rup(M, 8)
    if Mp <= cap:
        return Mp, Mp
    for tm in range(cap, 7, -8):
        mp = _rup(M, tm)
        if (mp - M) * 8 <= mp:          # accept <= 12.5% padding waste
            return tm, mp
    return cap, _rup(M, cap)


def _pick_n(N, cap):
    Np = _rup(N, 128)
    if Np <= cap:
        return Np, Np
    for tn in range(cap, 127, -128):
        if Np % tn == 0:
            return tn, Np
    return 128, Np


def _pick_k(K, cap=2048):
    if K <= cap:
        Kp = _rup(K, 8)
        return Kp, Kp                   # single K block, no accumulator revisits
    Kp = _rup(K, 128)
    for tk in range(cap, 127, -128):
        if Kp % tk == 0:
            return tk, Kp
    return 128, Kp


def _pad2(a, d0, d1):
    if a.shape == (d0, d1):
        return a
    return jnp.pad(a, ((0, d0 - a.shape[0]), (0, d1 - a.shape[1])))


def _pad1(a, d0):
    if a.shape[0] == d0:
        return a
    return jnp.pad(a, (0, d0 - a.shape[0]))


# ----------------------------------------------------------------------------
# Pallas kernels
# ----------------------------------------------------------------------------
def _mm_bn_act_kernel(x_ref, w_ref, s_ref, b_ref, o_ref, acc_ref, *, relu):
    """out = act((X @ W) * scale + bias), accumulated over the K grid axis."""
    @pl.when(pl.program_id(2) == 0)
    def _zero():
        acc_ref[...] = jnp.zeros_like(acc_ref)

    acc_ref[...] += jnp.dot(x_ref[...], w_ref[...],
                            preferred_element_type=jnp.float32)

    @pl.when(pl.program_id(2) == pl.num_programs(2) - 1)
    def _finalize():
        y = acc_ref[...] * s_ref[...] + b_ref[...]
        if relu:
            y = jnp.maximum(y, 0.0)
        o_ref[...] = y.astype(o_ref.dtype)


def matmul_bn_act(x, w, scale, bias, relu=True):
    """x: (M, K), w: (K, N) (bf16), scale/bias: (N,) f32 -> (M, N) bf16."""
    M, K = x.shape
    K2, N = w.shape
    assert K == K2
    TM, Mp = _pick_m(M, _MAX_MN)
    TN, Np = _pick_n(N, _MAX_MN)
    TK, Kp = _pick_k(K)
    # megacore: keep >= 2 parallel blocks when that is cheaply possible (v7x: 2 TCs)
    if Mp // TM == 1 and Np // TN == 1:
        if TM % 16 == 0:
            TM //= 2
        elif TN % 256 == 0:
            TN //= 2

    xp = _pad2(x.astype(_CDT), Mp, Kp)
    wp = _pad2(w.astype(_CDT), Kp, Np)
    sp = _pad1(scale.astype(jnp.float32), Np).reshape(1, Np)
    bp = _pad1(bias.astype(jnp.float32), Np).reshape(1, Np)

    out = pl.pallas_call(
        functools.partial(_mm_bn_act_kernel, relu=relu),
        out_shape=jax.ShapeDtypeStruct((Mp, Np), _CDT),
        grid_spec=pltpu.PrefetchScalarGridSpec(
            num_scalar_prefetch=0,
            grid=(Mp // TM, Np // TN, Kp // TK),
            in_specs=[
                pl.BlockSpec((TM, TK), lambda i, j, k: (i, k)),
                pl.BlockSpec((TK, TN), lambda i, j, k: (k, j)),
                pl.BlockSpec((1, TN), lambda i, j, k: (0, j)),
                pl.BlockSpec((1, TN), lambda i, j, k: (0, j)),
            ],
            out_specs=pl.BlockSpec((TM, TN), lambda i, j, k: (i, j)),
            scratch_shapes=[pltpu.VMEM((TM, TN), jnp.float32)],
        ),
        compiler_params=pltpu.CompilerParams(
            dimension_semantics=("parallel", "parallel", "arbitrary"),
            vmem_limit_bytes=_VMEM_LIMIT,
        ),
    )(xp, wp, sp, bp)
    if Mp != M or Np != N:
        out = out[:M, :N]
    return out


def _conv_row_kernel(x_ref, w_ref, s_ref, b_ref, o_ref, acc_ref, *, kw, relu):
    """Fused stride-1 conv: one padded input row per step, grid reduces over
    the kernel-row taps; the kw x Cin contraction happens in-kernel."""
    @pl.when(pl.program_id(2) == 0)
    def _zero():
        acc_ref[...] = jnp.zeros_like(acc_ref)

    Wo, _ = acc_ref.shape
    C = x_ref.shape[-1]
    for j in range(kw):
        xj = x_ref[pl.ds(j, Wo), :]             # (Wo, C)
        wj = w_ref[pl.ds(j * C, C), :]          # (C, Cout)
        acc_ref[...] += jnp.dot(xj, wj, preferred_element_type=jnp.float32)

    @pl.when(pl.program_id(2) == pl.num_programs(2) - 1)
    def _finalize():
        y = acc_ref[...] * s_ref[...] + b_ref[...]
        if relu:
            y = jnp.maximum(y, 0.0)
        o_ref[...] = y.astype(o_ref.dtype)


def conv_rows_fused(xpd, wp, scale, bias, relu, Ho, Wo):
    """Direct (no im2col) stride-1 conv on a pre-padded NHWC input."""
    N, Hp, Wp_, C = xpd.shape
    kh, kw, Cout = wp['kh'], wp['kw'], wp['cout']
    w3 = wp['w2'].reshape(kh, kw * C, Cout)
    s2 = scale.astype(jnp.float32).reshape(1, Cout)
    b2 = bias.astype(jnp.float32).reshape(1, Cout)

    return pl.pallas_call(
        functools.partial(_conv_row_kernel, kw=kw, relu=relu),
        out_shape=jax.ShapeDtypeStruct((N, Ho, Wo, Cout), xpd.dtype),
        grid_spec=pltpu.PrefetchScalarGridSpec(
            num_scalar_prefetch=0,
            grid=(N, Ho, kh),
            in_specs=[
                pl.BlockSpec((None, None, Wp_, C), lambda n, h, i: (n, h + i, 0, 0)),
                pl.BlockSpec((None, kw * C, Cout), lambda n, h, i: (i, 0, 0)),
                pl.BlockSpec((1, Cout), lambda n, h, i: (0, 0)),
                pl.BlockSpec((1, Cout), lambda n, h, i: (0, 0)),
            ],
            out_specs=pl.BlockSpec((None, None, Wo, Cout),
                                   lambda n, h, i: (n, h, 0, 0)),
            scratch_shapes=[pltpu.VMEM((Wo, Cout), jnp.float32)],
        ),
        compiler_params=pltpu.CompilerParams(
            dimension_semantics=("parallel", "parallel", "arbitrary"),
            vmem_limit_bytes=_VMEM_LIMIT,
        ),
    )(xpd, w3, s2, b2)


def _add_act_kernel(a_ref, b_ref, o_ref, *, relu):
    y = a_ref[...] + b_ref[...]
    if relu:
        y = jnp.maximum(y, 0)
    o_ref[...] = y


def add_act(a, b, relu=False):
    """Elementwise a + b (optional ReLU) via a tiled, lane-dense Pallas kernel."""
    shape, dtype = a.shape, a.dtype
    n = a.size
    LANE = 512
    rows = pl.cdiv(n, LANE)
    TR = min(1024, _rup(rows, 8))
    rows_p = _rup(rows, TR)
    tot = rows_p * LANE
    af, bf = a.reshape(-1), b.reshape(-1)
    if tot != n:
        af = jnp.pad(af, (0, tot - n))
        bf = jnp.pad(bf, (0, tot - n))
    a2 = af.reshape(rows_p, LANE)
    b2 = bf.reshape(rows_p, LANE)
    out = pl.pallas_call(
        functools.partial(_add_act_kernel, relu=relu),
        out_shape=jax.ShapeDtypeStruct((rows_p, LANE), dtype),
        grid_spec=pltpu.PrefetchScalarGridSpec(
            num_scalar_prefetch=0,
            grid=(rows_p // TR,),
            in_specs=[pl.BlockSpec((TR, LANE), lambda i: (i, 0)),
                      pl.BlockSpec((TR, LANE), lambda i: (i, 0))],
            out_specs=pl.BlockSpec((TR, LANE), lambda i: (i, 0)),
        ),
        compiler_params=pltpu.CompilerParams(
            dimension_semantics=("parallel",),
            vmem_limit_bytes=_VMEM_LIMIT,
        ),
    )(a2, b2)
    out = out.reshape(-1)
    if tot != n:
        out = out[:n]
    return out.reshape(shape)


# ----------------------------------------------------------------------------
# Weight preparation (done ONCE at parameter construction, bf16, MXU layout)
# ----------------------------------------------------------------------------
def prep_conv(w_oihw):
    O, C, kh, kw = w_oihw.shape
    w2 = jnp.transpose(w_oihw, (2, 3, 1, 0)).reshape(kh * kw * C, O).astype(_CDT)
    return {'w2': w2, 'kh': kh, 'kw': kw, 'cin': C, 'cout': O}


def _phase_taps_1d(k, p, op, r):
    """Taps / cropping / padding of output phase r (o % 2 == r) of a stride-2
    transposed conv expressed as a small stride-1 conv on the undilated input."""
    pt = k - 1 - p
    taps = [((t + r - pt) // 2, t) for t in range(k) if (t + r - pt) % 2 == 0]
    assert taps, "empty phase tap set"
    deltas = [d for d, _ in taps]
    tidx = [t for _, t in taps]
    assert deltas == list(range(deltas[0], deltas[-1] + 1))
    dmin, dmax = deltas[0], deltas[-1]
    crop = max(0, dmin)
    padl = max(0, -dmin)
    off_n = (k - 2 * p + op - r + 1) // 2     # phase output count = H - 1 + off_n
    padr = max(0, off_n + dmax - 1)
    return tidx, crop, padl, padr


def prep_convT(w_iohw, stride, padding, output_padding):
    Cin, Cout, kh, kw = w_iohw.shape
    # flipped + transposed weight of the equivalent forward conv
    w_conv = jnp.transpose(w_iohw[:, :, ::-1, ::-1], (1, 0, 2, 3))  # (Cout,Cin,kh,kw)
    if stride == 1:
        assert output_padding == 0
        return {'mode': 'conv', 'w': prep_conv(w_conv), 'pad': kh - 1 - padding}
    assert stride == 2, "only stride 1 / 2 transposed convs are used"
    phases = []
    for rh in (0, 1):
        th, ch_, plh, prh = _phase_taps_1d(kh, padding, output_padding, rh)
        for rw in (0, 1):
            tw, cw_, plw, prw = _phase_taps_1d(kw, padding, output_padding, rw)
            w_sub = w_conv[:, :, jnp.array(th), :][:, :, :, jnp.array(tw)]
            phases.append({'w': prep_conv(w_sub), 'rh': rh, 'rw': rw,
                           'crop': (ch_, cw_), 'pad': ((plh, prh), (plw, prw))})
    return {'mode': 'subpixel', 'phases': phases, 'k': kh, 'p': padding,
            'op': output_padding, 'cout': Cout}


# ----------------------------------------------------------------------------
# Conv / ConvTranspose / pooling / upsample built on the kernels above
# ----------------------------------------------------------------------------
def conv2d_bn_act(x, wp, stride, padding, scale, bias, relu):
    """x: (N,H,W,C) NHWC bf16. wp: prepped weight dict."""
    N, H, W, C = x.shape
    kh, kw, Cout = wp['kh'], wp['kw'], wp['cout']
    if isinstance(padding, int):
        pad = ((padding, padding), (padding, padding))
    else:
        pad = (tuple(padding[0]), tuple(padding[1]))
    if any(v for p in pad for v in p):
        xpd = jnp.pad(x, ((0, 0), pad[0], pad[1], (0, 0)))
    else:
        xpd = x
    Hp, Wp_ = xpd.shape[1], xpd.shape[2]
    Ho = (Hp - kh) // stride + 1
    Wo = (Wp_ - kw) // stride + 1

    # Fused (no-im2col) path for stride-1 spatial kernels.
    if stride == 1 and (kh > 1 or kw > 1) and Cout >= 16:
        return conv_rows_fused(xpd, wp, scale, bias, relu, Ho, Wo)

    if kh == 1 and kw == 1 and stride == 1:
        col = xpd.reshape(N * Ho * Wo, C)
    else:
        cols = []
        for i in range(kh):
            for j in range(kw):
                cols.append(xpd[:, i:i + stride * (Ho - 1) + 1:stride,
                                   j:j + stride * (Wo - 1) + 1:stride, :])
        col = jnp.concatenate(cols, axis=-1).reshape(N * Ho * Wo, kh * kw * C)
    y = matmul_bn_act(col, wp['w2'], scale, bias, relu)
    return y.reshape(N, Ho, Wo, Cout)


def convT2d_bn_act(x, tp, scale, bias, relu):
    """Transposed conv. stride 1 -> plain conv; stride 2 -> sub-pixel phases."""
    if tp['mode'] == 'conv':
        return conv2d_bn_act(x, tp['w'], 1, tp['pad'], scale, bias, relu)
    N, H, W, _ = x.shape
    k, p, op = tp['k'], tp['p'], tp['op']
    Hout = (H - 1) * 2 - 2 * p + k + op
    Wout = (W - 1) * 2 - 2 * p + k + op
    out = jnp.zeros((N, Hout, Wout, tp['cout']), x.dtype)
    for ph in tp['phases']:
        ch_, cw_ = ph['crop']
        xs = x[:, ch_:, cw_:, :] if (ch_ or cw_) else x
        y = conv2d_bn_act(xs, ph['w'], 1, ph['pad'], scale, bias, relu)
        nrh = (Hout - ph['rh'] + 1) // 2
        nrw = (Wout - ph['rw'] + 1) // 2
        y = y[:, :nrh, :nrw, :]
        out = out.at[:, ph['rh']::2, ph['rw']::2, :].set(y)
    return out


def maxpool_3x3_s2_p1(x):
    """nn.MaxPool2d(3, 2, 1) — small window reduction done as glue."""
    N, H, W, C = x.shape
    xp = jnp.pad(x, ((0, 0), (1, 1), (1, 1), (0, 0)), constant_values=-jnp.inf)
    Ho = (H + 2 - 3) // 2 + 1
    Wo = (W + 2 - 3) // 2 + 1
    out = None
    for i in range(3):
        for j in range(3):
            patch = xp[:, i:i + 2 * (Ho - 1) + 1:2, j:j + 2 * (Wo - 1) + 1:2, :]
            out = patch if out is None else jnp.maximum(out, patch)
    return out


def upsample_nearest(x, out_h, out_w):
    """F.interpolate(mode='nearest') semantics: src = floor(dst * in / out)."""
    N, H, W, C = x.shape
    if H == out_h and W == out_w:
        return x
    rows = (jnp.arange(out_h) * H) // out_h
    cols = (jnp.arange(out_w) * W) // out_w
    return x[:, rows][:, :, cols]


# ----------------------------------------------------------------------------
# Deterministic parameter construction
# ----------------------------------------------------------------------------
class PG:
    def __init__(self, seed=0):
        self._key = jax.random.PRNGKey(seed)
        self._i = 0

    def _next(self):
        self._i += 1
        return jax.random.fold_in(self._key, self._i)

    def conv(self, cout, cin, k):
        fan_in = cin * k * k
        return jax.random.normal(self._next(), (cout, cin, k, k),
                                 jnp.float32) * math.sqrt(2.0 / fan_in)

    def convT(self, cin, cout, k):
        fan_in = cin * k * k
        return jax.random.normal(self._next(), (cin, cout, k, k),
                                 jnp.float32) * math.sqrt(2.0 / fan_in)

    def bn(self, c, eps=1e-5):
        gamma = 1.0 + 0.1 * jax.random.normal(self._next(), (c,), jnp.float32)
        beta = 0.05 * jax.random.normal(self._next(), (c,), jnp.float32)
        mean = 0.05 * jax.random.normal(self._next(), (c,), jnp.float32)
        var = jnp.ones((c,), jnp.float32)
        scale = gamma / jnp.sqrt(var + eps)
        bias = beta - mean * scale
        return scale, bias

    def bias(self, c):
        return 0.01 * jax.random.normal(self._next(), (c,), jnp.float32)


def make_bottleneck(pg, inplanes, planes, stride, downsample):
    p = {
        'c1': (prep_conv(pg.conv(planes, inplanes, 1)),) + pg.bn(planes),
        'c2': (prep_conv(pg.conv(planes, planes, 3)),) + pg.bn(planes),
        'c3': (prep_conv(pg.conv(planes * 4, planes, 1)),) + pg.bn(planes * 4),
        'stride': stride,
    }
    if downsample:
        p['ds'] = (prep_conv(pg.conv(planes * 4, inplanes, 1)),) + pg.bn(planes * 4)
    return p


def make_layer(pg, inplanes, planes, blocks, stride):
    layer = [make_bottleneck(pg, inplanes, planes, stride, True)]
    for _ in range(blocks - 1):
        layer.append(make_bottleneck(pg, planes * 4, planes, 1, False))
    return layer


def make_decoder(pg, in_planes, out_planes, k, stride, padding, output_padding):
    mid = in_planes // 4
    return dict(
        c1=(prep_conv(pg.conv(mid, in_planes, 1)),) + pg.bn(mid),
        tp=(prep_convT(pg.convT(mid, mid, k), stride, padding, output_padding),)
           + pg.bn(mid),
        c2=(prep_conv(pg.conv(out_planes, mid, 1)),) + pg.bn(out_planes))


def make_params(seed=0):
    pg = PG(seed)
    P = {}
    # in_block (ResNet-50 stem)
    P['conv1'] = (prep_conv(pg.conv(64, 3, 7)),) + pg.bn(64)
    # encoders (ResNet-50 layer1..4, synthetic weights)
    P['layer1'] = make_layer(pg, 64, 64, 3, 1)
    P['layer2'] = make_layer(pg, 256, 128, 4, 2)
    P['layer3'] = make_layer(pg, 512, 256, 6, 2)
    P['layer4'] = make_layer(pg, 1024, 512, 3, 2)
    # decoders
    P['dec1'] = make_decoder(pg, 256, 64, 3, 1, 1, 0)
    P['dec2'] = make_decoder(pg, 512, 256, 3, 2, 1, 1)
    P['dec3'] = make_decoder(pg, 1024, 512, 3, 2, 1, 1)
    P['dec4'] = make_decoder(pg, 2048, 1024, 3, 2, 1, 1)
    # tp_conv1: ConvTranspose2d(64,32,3,2,1,1) (bias) + BN + ReLU
    w, b = pg.convT(64, 32, 3), pg.bias(32)
    s, bb = pg.bn(32)
    P['tp1'] = (prep_convT(w, 2, 1, 1), s, bb + b * s)
    # conv2: Conv2d(32,32,3,1,1) (bias) + BN + ReLU
    w, b = pg.conv(32, 32, 3), pg.bias(32)
    s, bb = pg.bn(32)
    P['c2'] = (prep_conv(w), s, bb + b * s)
    # tp_conv2: ConvTranspose2d(32,16,2,2,0) (bias), no BN; lsm = ReLU after
    P['tp2'] = (prep_convT(pg.convT(32, 16, 2), 2, 0, 0),
                jnp.ones((16,), jnp.float32), pg.bias(16))
    # conv3: ResidualBlock(48) then Conv2d(48,3,3,1,1) (bias) + ReLU
    P['rb1'] = prep_conv(pg.conv(48, 48, 3))
    P['rb2'] = prep_conv(pg.conv(48, 48, 3))
    P['c3'] = (prep_conv(pg.conv(3, 48, 3)), jnp.ones((3,), jnp.float32), pg.bias(3))
    # TODO(synk): GCN_SGR / GCN_CGR definitions were not provided; stand-ins are
    # 1x1 conv + BN + ReLU blocks that preserve the (N, 512, H/8, W/8) contract.
    P['sp'] = (prep_conv(pg.conv(512, 512, 1)),) + pg.bn(512)
    P['ca'] = (prep_conv(pg.conv(512, 512, 1)),) + pg.bn(512)
    return P


# ----------------------------------------------------------------------------
# Forward pass
# ----------------------------------------------------------------------------
def bottleneck_fwd(x, p):
    identity = x
    y = conv2d_bn_act(x, p['c1'][0], 1, 0, p['c1'][1], p['c1'][2], True)
    y = conv2d_bn_act(y, p['c2'][0], p['stride'], 1, p['c2'][1], p['c2'][2], True)
    y = conv2d_bn_act(y, p['c3'][0], 1, 0, p['c3'][1], p['c3'][2], False)
    if 'ds' in p:
        identity = conv2d_bn_act(x, p['ds'][0], p['stride'], 0,
                                 p['ds'][1], p['ds'][2], False)
    return add_act(y, identity, relu=True)


def run_layer(x, layer):
    for blk in layer:
        x = bottleneck_fwd(x, blk)
    return x


def decoder_fwd(x, d):
    y = conv2d_bn_act(x, d['c1'][0], 1, 0, d['c1'][1], d['c1'][2], True)
    y = convT2d_bn_act(y, d['tp'][0], d['tp'][1], d['tp'][2], True)
    y = conv2d_bn_act(y, d['c2'][0], 1, 0, d['c2'][1], d['c2'][2], True)
    return y


def gcn_dehaze_forward(P, x_nchw, z_nchw, f_nchw):
    # NCHW f32 -> NHWC bf16
    x = jnp.transpose(x_nchw, (0, 2, 3, 1)).astype(_CDT)
    z = jnp.transpose(z_nchw, (0, 2, 3, 1)).astype(_CDT)
    f = jnp.transpose(f_nchw, (0, 2, 3, 1)).astype(_CDT)

    # in_block: conv1(7x7,s2) + BN + ReLU + maxpool(3,2,1)
    h = conv2d_bn_act(x, P['conv1'][0], 2, 3, P['conv1'][1], P['conv1'][2], True)
    h = maxpool_3x3_s2_p1(h)

    e1 = run_layer(h, P['layer1'])
    e2 = run_layer(e1, P['layer2'])

    e2_1 = conv2d_bn_act(e2, P['sp'][0], 1, 0, P['sp'][1], P['sp'][2], True)
    e2_2 = conv2d_bn_act(e2, P['ca'][0], 1, 0, P['ca'][1], P['ca'][2], True)
    e2_3 = add_act(e2_1, e2_2, relu=False)

    e3 = run_layer(e2_3, P['layer3'])
    e4 = run_layer(e3, P['layer4'])

    d4 = add_act(e3, upsample_nearest(decoder_fwd(e4, P['dec4']),
                                      e3.shape[1], e3.shape[2]))
    d3 = add_act(e2, upsample_nearest(decoder_fwd(d4, P['dec3']),
                                      e2.shape[1], e2.shape[2]))
    d2 = add_act(e1, upsample_nearest(decoder_fwd(d3, P['dec2']),
                                      e1.shape[1], e1.shape[2]))
    d1 = add_act(h, upsample_nearest(decoder_fwd(d2, P['dec1']),
                                     h.shape[1], h.shape[2]))

    y = convT2d_bn_act(d1, P['tp1'][0], P['tp1'][1], P['tp1'][2], True)
    y = conv2d_bn_act(y, P['c2'][0], 1, 1, P['c2'][1], P['c2'][2], True)
    # tp_conv2 followed by lsm=ReLU -> fuse relu into the epilogue
    y = convT2d_bn_act(y, P['tp2'][0], P['tp2'][1], P['tp2'][2], True)

    y = jnp.concatenate([y, z, f], axis=-1)  # torch.cat along channel dim

    # conv3 = ResidualBlock(48) -> Conv2d(48,3,3,1,1) -> ReLU
    ones48 = jnp.ones((48,), jnp.float32)
    zeros48 = jnp.zeros((48,), jnp.float32)
    r1 = conv2d_bn_act(y, P['rb1'], 1, 1, ones48, zeros48, True)
    r2 = conv2d_bn_act(r1, P['rb2'], 1, 1, ones48, zeros48, False)
    y = add_act(y, r2, relu=False)          # droprate == 0 -> dropout is no-op
    y = conv2d_bn_act(y, P['c3'][0], 1, 1, P['c3'][1], P['c3'][2], True)

    return jnp.transpose(y, (0, 3, 1, 2)).astype(jnp.float32)   # back to NCHW


# ----------------------------------------------------------------------------
# Small numerical self-checks against XLA reference convolutions
# ----------------------------------------------------------------------------
def _self_check():
    key = jax.random.PRNGKey(42)
    k1, k2, k3, k4 = jax.random.split(key, 4)
    x = jax.random.normal(k1, (1, 5, 6, 16), jnp.float32).astype(_CDT)
    xf = x.astype(jnp.float32)
    w = jax.random.normal(k2, (24, 16, 3, 3), jnp.float32) * 0.1
    scale = 1.0 + 0.1 * jax.random.normal(k3, (24,), jnp.float32)
    bias = 0.1 * jax.random.normal(k4, (24,), jnp.float32)
    wp = prep_conv(w)
    w_hwio = jnp.transpose(w, (2, 3, 1, 0)).astype(_CDT).astype(jnp.float32)
    # (a) conv: stride 1 exercises the fused row kernel; stride 2 the im2col path
    for stride in (1, 2):
        got = conv2d_bn_act(x, wp, stride, 1, scale, bias, True).astype(jnp.float32)
        ref = jax.lax.conv_general_dilated(
            xf, w_hwio, (stride, stride), [(1, 1), (1, 1)],
            dimension_numbers=("NHWC", "HWIO", "NHWC"))
        ref = jnp.maximum(ref * scale + bias, 0.0)
        assert got.shape == ref.shape, (got.shape, ref.shape)
        assert float(jnp.max(jnp.abs(got - ref))) < 0.1, "conv check failed"
    # (b) stride-2 transposed convs (sub-pixel decomposition)
    for (k, p, op) in ((3, 1, 1), (2, 0, 0)):
        wT = jax.random.normal(jax.random.fold_in(key, k),
                               (16, 24, k, k), jnp.float32) * 0.1
        tp = prep_convT(wT, 2, p, op)
        got = convT2d_bn_act(x, tp, scale, bias, True).astype(jnp.float32)
        w_conv = jnp.transpose(wT[:, :, ::-1, ::-1], (1, 0, 2, 3))
        w_ref = jnp.transpose(w_conv, (2, 3, 1, 0)).astype(_CDT).astype(jnp.float32)
        pt, pb = k - 1 - p, k - 1 - p + op
        ref = jax.lax.conv_general_dilated(
            xf, w_ref, (1, 1), [(pt, pb), (pt, pb)], lhs_dilation=(2, 2),
            dimension_numbers=("NHWC", "HWIO", "NHWC"))
        ref = jnp.maximum(ref * scale + bias, 0.0)
        assert got.shape == ref.shape, (got.shape, ref.shape)
        assert float(jnp.max(jnp.abs(got - ref))) < 0.1, "convT check failed"


# ----------------------------------------------------------------------------
if __name__ == "__main__":
    _self_check()

    key = jax.random.PRNGKey(0)
    kx, kz, kf = jax.random.split(key, 3)
    B, H, W = 1, 32, 32
    x = jax.random.normal(kx, (B, 3, H, W), jnp.float32)
    z = jax.random.normal(kz, (B, 16, H, W), jnp.float32)
    f = jax.random.normal(kf, (B, 16, H, W), jnp.float32)

    params = make_params(seed=0)
    out = gcn_dehaze_forward(params, x, z, f)
    out = jax.block_until_ready(out)
    assert out.shape == (B, 3, H, W), out.shape
    assert bool(jnp.all(jnp.isfinite(out)))
    print("KERNEL_OK")
</pallas_src>

<mosaic_0001>
module attributes {stable_mosaic.version = 11 : i64} {
  func.func @_conv_row_kernel(%arg0: i32, %arg1: i32, %arg2: i32, %arg3: memref<1x1x8x16xbf16, #tpu.memory_space<vmem>>, %arg4: memref<1x48x24xbf16, #tpu.memory_space<vmem>>, %arg5: memref<1x24xf32, #tpu.memory_space<vmem>>, %arg6: memref<1x24xf32, #tpu.memory_space<vmem>>, %arg7: memref<1x1x6x24xbf16, #tpu.memory_space<vmem>>, %arg8: memref<6x24xf32, #tpu.memory_space<vmem>>) attributes {dimension_semantics = [#tpu.dimension_semantics<parallel>, #tpu.dimension_semantics<parallel>, #tpu.dimension_semantics<arbitrary>], iteration_bounds = array<i64: 1, 5, 3>, scalar_prefetch = 0 : i64, scratch_operands = 1 : i64, tpu.core_type = #tpu.core_type<tc>, window_params = [{transform_indices = @transform_0, window_bounds = array<i64: 1, 1, 8, 16>}, {transform_indices = @transform_1, window_bounds = array<i64: 1, 48, 24>}, {pipeline_mode = #tpu.pipeline_mode<synchronous>, transform_indices = @transform_2, window_bounds = array<i64: 1, 24>}, {pipeline_mode = #tpu.pipeline_mode<synchronous>, transform_indices = @transform_3, window_bounds = array<i64: 1, 24>}, {transform_indices = @transform_4, window_bounds = array<i64: 1, 1, 6, 24>}]} {
    %c0_i32 = arith.constant 0 : i32
    %0 = arith.cmpi eq, %arg2, %c0_i32 : i32
    %1 = arith.extui %0 : i1 to i32
    %c0_i32_0 = arith.constant 0 : i32
    %2 = arith.cmpi ne, %1, %c0_i32_0 : i32
    scf.if %2 {
      %cst_32 = arith.constant 0.000000e+00 : f32
      %30 = vector.broadcast %cst_32 : f32 to vector<6x24xf32>
      %c0_33 = arith.constant 0 : index
      %c0_34 = arith.constant 0 : index
      %31 = vector.load %arg8[%c0_33, %c0_34] : memref<6x24xf32, #tpu.memory_space<vmem>>, vector<6x24xf32>
      tpu.vector_store %arg8[%c0_33, %c0_34], %30 {strides = array<i32>} : memref<6x24xf32, #tpu.memory_space<vmem>>, vector<6x24xf32>,
    } else {
    }
    %c0 = arith.constant 0 : index
    %c0_1 = arith.constant 0 : index
    %c0_2 = arith.constant 0 : index
    %c0_3 = arith.constant 0 : index
    %3 = vector.load %arg3[%c0, %c0_1, %c0_2, %c0_3] : memref<1x1x8x16xbf16, #tpu.memory_space<vmem>>, vector<1x1x6x16xbf16>
    %4 = vector.shape_cast %3 : vector<1x1x6x16xbf16> to vector<6x16xbf16>
    %c0_4 = arith.constant 0 : index
    %c0_5 = arith.constant 0 : index
    %c0_6 = arith.constant 0 : index
    %5 = vector.load %arg4[%c0_4, %c0_5, %c0_6] : memref<1x48x24xbf16, #tpu.memory_space<vmem>>, vector<1x16x24xbf16>
    %6 = vector.shape_cast %5 : vector<1x16x24xbf16> to vector<16x24xbf16>
    %c0_7 = arith.constant 0 : index
    %c0_8 = arith.constant 0 : index
    %7 = vector.load %arg8[%c0_7, %c0_8] : memref<6x24xf32, #tpu.memory_space<vmem>>, vector<6x24xf32>
    %cst = arith.constant dense<0.000000e+00> : vector<6x24xf32>
    %8 = tpu.matmul %4, %6, %cst {dimension_numbers = #tpu.dot_dimension_numbers<[1], [0], [0], [1], [0, 0, 1, 1], [], []>} : vector<6x16xbf16>, vector<16x24xbf16>, vector<6x24xf32> -> vector<6x24xf32>
    %9 = arith.addf %7, %8 : vector<6x24xf32>
    %c0_9 = arith.constant 0 : index
    %c0_10 = arith.constant 0 : index
    %10 = vector.load %arg8[%c0_9, %c0_10] : memref<6x24xf32, #tpu.memory_space<vmem>>, vector<6x24xf32>
    tpu.vector_store %arg8[%c0_9, %c0_10], %9 {strides = array<i32>} : memref<6x24xf32, #tpu.memory_space<vmem>>, vector<6x24xf32>,
    %c0_11 = arith.constant 0 : index
    %c0_12 = arith.constant 0 : index
    %c1 = arith.constant 1 : index
    %c0_13 = arith.constant 0 : index
    %11 = vector.load %arg3[%c0_11, %c0_12, %c1, %c0_13] : memref<1x1x8x16xbf16, #tpu.memory_space<vmem>>, vector<1x1x6x16xbf16>
    %12 = vector.shape_cast %11 : vector<1x1x6x16xbf16> to vector<6x16xbf16>
    %c0_14 = arith.constant 0 : index
    %c16 = arith.constant 16 : index
    %c0_15 = arith.constant 0 : index
    %13 = vector.load %arg4[%c0_14, %c16, %c0_15] : memref<1x48x24xbf16, #tpu.memory_space<vmem>>, vector<1x16x24xbf16>
    %14 = vector.shape_cast %13 : vector<1x16x24xbf16> to vector<16x24xbf16>
    %c0_16 = arith.constant 0 : index
    %c0_17 = arith.constant 0 : index
    %15 = vector.load %arg8[%c0_16, %c0_17] : memref<6x24xf32, #tpu.memory_space<vmem>>, vector<6x24xf32>
    %cst_18 = arith.constant dense<0.000000e+00> : vector<6x24xf32>
    %16 = tpu.matmul %12, %14, %cst_18 {dimension_numbers = #tpu.dot_dimension_numbers<[1], [0], [0], [1], [0, 0, 1, 1], [], []>} : vector<6x16xbf16>, vector<16x24xbf16>, vector<6x24xf32> -> vector<6x24xf32>
    %17 = arith.addf %15, %16 : vector<6x24xf32>
    %c0_19 = arith.constant 0 : index
    %c0_20 = arith.constant 0 : index
    %18 = vector.load %arg8[%c0_19, %c0_20] : memref<6x24xf32, #tpu.memory_space<vmem>>, vector<6x24xf32>
    tpu.vector_store %arg8[%c0_19, %c0_20], %17 {strides = array<i32>} : memref<6x24xf32, #tpu.memory_space<vmem>>, vector<6x24xf32>,
    %c0_21 = arith.constant 0 : index
    %c0_22 = arith.constant 0 : index
    %c2 = arith.constant 2 : index
    %c0_23 = arith.constant 0 : index
    %19 = vector.load %arg3[%c0_21, %c0_22, %c2, %c0_23] : memref<1x1x8x16xbf16, #tpu.memory_space<vmem>>, vector<1x1x6x16xbf16>
    %20 = vector.shape_cast %19 : vector<1x1x6x16xbf16> to vector<6x16xbf16>
    %c0_24 = arith.constant 0 : index
    %c32 = arith.constant 32 : index
    %c0_25 = arith.constant 0 : index
    %21 = vector.load %arg4[%c0_24, %c32, %c0_25] : memref<1x48x24xbf16, #tpu.memory_space<vmem>>, vector<1x16x24xbf16>
    %22 = vector.shape_cast %21 : vector<1x16x24xbf16> to vector<16x24xbf16>
    %c0_26 = arith.constant 0 : index
    %c0_27 = arith.constant 0 : index
    %23 = vector.load %arg8[%c0_26, %c0_27] : memref<6x24xf32, #tpu.memory_space<vmem>>, vector<6x24xf32>
    %cst_28 = arith.constant dense<0.000000e+00> : vector<6x24xf32>
    %24 = tpu.matmul %20, %22, %cst_28 {dimension_numbers = #tpu.dot_dimension_numbers<[1], [0], [0], [1], [0, 0, 1, 1], [], []>} : vector<6x16xbf16>, vector<16x24xbf16>, vector<6x24xf32> -> vector<6x24xf32>
    %25 = arith.addf %23, %24 : vector<6x24xf32>
    %c0_29 = arith.constant 0 : index
    %c0_30 = arith.constant 0 : index
    %26 = vector.load %arg8[%c0_29, %c0_30] : memref<6x24xf32, #tpu.memory_space<vmem>>, vector<6x24xf32>
    tpu.vector_store %arg8[%c0_29, %c0_30], %25 {strides = array<i32>} : memref<6x24xf32, #tpu.memory_space<vmem>>, vector<6x24xf32>,
    %c2_i32 = arith.constant 2 : i32
    %27 = arith.cmpi eq, %arg2, %c2_i32 : i32
    %28 = arith.extui %27 : i1 to i32
    %c0_i32_31 = arith.constant 0 : i32
    %29 = arith.cmpi ne, %28, %c0_i32_31 : i32
    scf.if %29 {
      %c0_32 = arith.constant 0 : index
      %c0_33 = arith.constant 0 : index
      %30 = vector.load %arg8[%c0_32, %c0_33] : memref<6x24xf32, #tpu.memory_space<vmem>>, vector<6x24xf32>
      %c0_34 = arith.constant 0 : index
      %c0_35 = arith.constant 0 : index
      %31 = vector.load %arg5[%c0_34, %c0_35] : memref<1x24xf32, #tpu.memory_space<vmem>>, vector<1x24xf32>
      %32 = vector.broadcast %31 : vector<1x24xf32> to vector<6x24xf32>
      %33 = arith.mulf %30, %32 : vector<6x24xf32>
      %c0_36 = arith.constant 0 : index
      %c0_37 = arith.constant 0 : index
      %34 = vector.load %arg6[%c0_36, %c0_37] : memref<1x24xf32, #tpu.memory_space<vmem>>, vector<1x24xf32>
      %35 = vector.broadcast %34 : vector<1x24xf32> to vector<6x24xf32>
      %36 = arith.addf %33, %35 : vector<6x24xf32>
      %cst_38 = arith.constant 0.000000e+00 : f32
      %37 = vector.broadcast %cst_38 : f32 to vector<6x24xf32>
      %38 = arith.maximumf %36, %37 : vector<6x24xf32>
      %39 = arith.truncf %38 : vector<6x24xf32> to vector<6x24xbf16>
      %c0_39 = arith.constant 0 : index
      %c0_40 = arith.constant 0 : index
      %c0_41 = arith.constant 0 : index
      %c0_42 = arith.constant 0 : index
      %40 = vector.load %arg7[%c0_39, %c0_40, %c0_41, %c0_42] : memref<1x1x6x24xbf16, #tpu.memory_space<vmem>>, vector<1x1x6x24xbf16>
      %41 = vector.shape_cast %40 : vector<1x1x6x24xbf16> to vector<6x24xbf16>
      %42 = vector.shape_cast %39 : vector<6x24xbf16> to vector<1x1x6x24xbf16>
      tpu.vector_store %arg7[%c0_39, %c0_40, %c0_41, %c0_42], %42 {strides = array<i32>} : memref<1x1x6x24xbf16, #tpu.memory_space<vmem>>, vector<1x1x6x24xbf16>,
    } else {
    }
    return
  }
  func.func @transform_0(%arg0: i32, %arg1: i32, %arg2: i32) -> (i32, i32, i32, i32) {
    %0 = arith.addi %arg1, %arg2 : i32
    %c0_i32 = arith.constant 0 : i32
    %c0_i32_0 = arith.constant 0 : i32
    %c0_i32_1 = arith.constant 0 : i32
    return %arg0, %0, %c0_i32, %c0_i32_0 : i32, i32, i32, i32
  }
  func.func @transform_1(%arg0: i32, %arg1: i32, %arg2: i32) -> (i32, i32, i32) {
    %c0_i32 = arith.constant 0 : i32
    %c0_i32_0 = arith.constant 0 : i32
    %c0_i32_1 = arith.constant 0 : i32
    return %arg2, %c0_i32, %c0_i32_0 : i32, i32, i32
  }
  func.func @transform_2(%arg0: i32, %arg1: i32, %arg2: i32) -> (i32, i32) {
    %c0_i32 = arith.constant 0 : i32
    %c0_i32_0 = arith.constant 0 : i32
    %c0_i32_1 = arith.constant 0 : i32
    return %c0_i32, %c0_i32_0 : i32, i32
  }
  func.func @transform_3(%arg0: i32, %arg1: i32, %arg2: i32) -> (i32, i32) {
    %c0_i32 = arith.constant 0 : i32
    %c0_i32_0 = arith.constant 0 : i32
    %c0_i32_1 = arith.constant 0 : i32
    return %c0_i32, %c0_i32_0 : i32, i32
  }
  func.func @transform_4(%arg0: i32, %arg1: i32, %arg2: i32) -> (i32, i32, i32, i32) {
    %c0_i32 = arith.constant 0 : i32
    %c0_i32_0 = arith.constant 0 : i32
    %c0_i32_1 = arith.constant 0 : i32
    return %arg0, %arg1, %c0_i32, %c0_i32_0 : i32, i32, i32, i32
  }
}

</mosaic_0001>

<llo_original>
// kernel: tpu_custom_call.1
$region0: #{tpu_custom_call.1}
  #allocation0 [shape = 'u32[]', space=smem, size = 0x4, offset = 0x4, fixed_abs, tag = 'smem constant byte address 0x4 - core index']
  #allocation1 [shape = 'u32[144,128]{1,0:T(1,128)}', space=vmem, size = 0x12000, scoped, tag = 'internal scratch']
  #allocation2 [shape = 'f32[6,24]{1,0:T(8,128)}', space=vmem, size = 0x1000, scoped, tag = 'scratch operand']
  %s0 = inlined_call_operand.hbm [shape: bf16[1,7,8,16], index: 0, kind: input, shape index: {}]
  %s1 = inlined_call_operand.hbm [shape: bf16[3,48,24], index: 1, kind: input, shape index: {}]
  %s2 = inlined_call_operand.hbm [shape: f32[1,24], index: 2, kind: input, shape index: {}]
  %s3 = inlined_call_operand.hbm [shape: f32[1,24], index: 3, kind: input, shape index: {}]
  %s4 = inlined_call_operand.hbm [shape: bf16[1,5,6,24], index: 4, kind: output, shape index: {}]
  %s5 = sld [smem:[#allocation0]]
  $region73: #{tpu_custom_call.1} parent=0
    _
  %s7 = ssub.s32 1, %s5
  %s8 = scalar_select 0, %s7, %s5
  $region1: #{tpu_custom_call.1} parent=0
    #allocation3 [shape = 'u8[4096]{0}', space=vmem, size = 0x1000, scoped, tag = 'input window, operand 0']
    #allocation4 [shape = 's32[2]{0}', space=sflag, size = 0x8, scoped, tag = 'scoped memory for tpu_custom_call.1']
    #allocation5 [shape = 's32[2]{0}', space=sflag, size = 0x8, scoped, tag = 'scoped memory for tpu_custom_call.1']
    #allocation6 [shape = 'u8[24576]{0}', space=vmem, size = 0x6000, scoped, tag = 'input window, operand 1']
    #allocation7 [shape = 's32[2]{0}', space=sflag, size = 0x8, scoped, tag = 'scoped memory for tpu_custom_call.1']
    #allocation8 [shape = 'u8[512]{0}', space=vmem, size = 0x400, scoped, tag = 'input window, operand 2, single buffered']
    #allocation9 [shape = 'u8[512]{0}', space=vmem, size = 0x400, scoped, tag = 'input window, operand 3, single buffered']
    #allocation10 [shape = 's32[1]{0}', space=sflag, size = 0x4, scoped, tag = 'scoped memory for tpu_custom_call.1']
    #allocation11 [shape = 'u8[4096]{0}', space=vmem, size = 0x1000, scoped, tag = 'output window, operand 0']
    %9 = vsyncpa [#allocation4], 0
    %s10 = scalar_lea.sflag [#allocation4], 1
    %11 = vsyncpa %s10, 0
    %12 = vsyncpa [#allocation7], 0
    %s13 = scalar_lea.sflag [#allocation7], 1
    %14 = vsyncpa %s13, 0
    %15 = vsyncpa [#allocation10], 0
    %16 = vsyncpa [#allocation5], 0
    %s17 = scalar_lea.sflag [#allocation5], 1
    %18 = vsyncpa %s17, 0
    loop: start=0, step=1, limit=17
    $region2: #{tpu_custom_call.1} parent=1 // loop_pre_header
      _
    $region3: #{tpu_custom_call.1} parent=1 // loop_header
      %s20 = sphi 0, %s24
      %p21 = scmp.ge.s32.totalorder %s20, 17
      %s27 = sphi 0, %s46
      %s28 = sphi 0, %s42
      %s29 = sphi 0, %s38
      %s30 = sphi 0, %s27
      %s31 = sphi 0, %s28
      %s32 = sphi 0, %s29
      %s33 = sphi 0, %s30
      %s34 = sphi 0, %s31
      %s35 = sphi 0, %s32
      %s53 = sphi 0, %s55
      %s56 = sphi 0, %s53
      %s57 = sphi 0, %s56
      %s73 = sphi 0, %s57
      %s79 = sphi 0, %s81
      %s82 = sphi 0, %s79
      %s83 = sphi 0, %s82
      %s99 = sphi 0, %s83
      %s103 = sphi 0, %s103
      %s105 = sphi 0, %s103
      %s106 = sphi 0, %s105
      %s120 = sphi 0, %s106
      %s124 = sphi 0, %s124
      %s126 = sphi 0, %s124
      %s127 = sphi 0, %s126
      %s141 = sphi 0, %s127
      %s149 = sphi 0, %s151
      %s152 = sphi 0, %s149
      %s153 = sphi 0, %s152
      %s169 = sphi 0, %s153
    $region4: #{tpu_custom_call.1} parent=1 // loop_header_branch
      %23 = sbr.rel (%p21) target = $region8
    $region5: #{tpu_custom_call.1} parent=1 // loop_body
      %s25 = ssub.s32 %s20, 1
      %s26 = ssub.s32 %s20, 2
      %s36 = sadd.s32 1, %s29
      %p37 = scmp.ge.s32.totalorder %s36, 3
      %s38 = scalar_select %p37, 0, %s36
      %s39 = sadd.s32 1, %s28
      %s40 = scalar_select %p37, %s39, %s28
      %p41 = scmp.ge.s32.totalorder %s40, 5
      %s42 = scalar_select %p41, 0, %s40
      %s43 = sadd.s32 1, %s27
      %s44 = scalar_select %p41, %s43, %s27
      %p45 = scmp.ge.s32.totalorder %s44, 1
      %s46 = scalar_select %p45, 0, %s44
      %s47 = sadd.s32 %s28, %s29
      %s48 = sadd.s32 %s42, %s38
      %s49 = ssub.s32 %s27, %s46
      %s50 = ssub.s32 %s47, %s48
      %s51 = sor.u32 %s49, %s50
      %p52 = scmp.eq.s32.totalorder %s51, 0
      %s54 = sadd.s32 %s53, 1
      %s55 = scalar_select %p52, %s53, %s54
      %p58 = pneg %p52
      %p59 = scmp.eq.s32.totalorder %s20, 14
      %p60 = por %p58, %p59
      %p61 = scmp.ne.s32.totalorder %s53, %s56
      %p62 = scmp.eq.s32.totalorder %s20, 0
      %p63 = por %p61, %p62
      %p64 = scmp.ne.s32.totalorder %s53, %s56
      %p65 = scmp.eq.s32.totalorder %s25, 14
      %p66 = por %p64, %p65
      %p67 = scmp.ne.s32.totalorder %s56, %s57
      %p68 = scmp.eq.s32.totalorder %s25, 0
      %p69 = por %p67, %p68
      %p70 = scmp.ne.s32.totalorder %s56, %s57
      %p71 = scmp.eq.s32.totalorder %s26, 14
      %p72 = por %p70, %p71
      %p74 = scmp.ne.s32.totalorder %s57, %s73
      %p75 = scmp.eq.s32.totalorder %s26, 0
      %p76 = por %p74, %p75
      %s77 = ssub.s32 %s29, %s38
      %p78 = scmp.eq.s32.totalorder %s77, 0
      %s80 = sadd.s32 %s79, 1
      %s81 = scalar_select %p78, %s79, %s80
      %p84 = pneg %p78
      %p85 = scmp.eq.s32.totalorder %s20, 14
      %p86 = por %p84, %p85
      %p87 = scmp.ne.s32.totalorder %s79, %s82
      %p88 = scmp.eq.s32.totalorder %s20, 0
      %p89 = por %p87, %p88
      %p90 = scmp.ne.s32.totalorder %s79, %s82
      %p91 = scmp.eq.s32.totalorder %s25, 14
      %p92 = por %p90, %p91
      %p93 = scmp.ne.s32.totalorder %s82, %s83
      %p94 = scmp.eq.s32.totalorder %s25, 0
      %p95 = por %p93, %p94
      %p96 = scmp.ne.s32.totalorder %s82, %s83
      %p97 = scmp.eq.s32.totalorder %s26, 14
      %p98 = por %p96, %p97
      %p100 = scmp.ne.s32.totalorder %s83, %s99
      %p101 = scmp.eq.s32.totalorder %s26, 0
      %p102 = por %p100, %p101
      %s104 = sadd.s32 %s103, 1
      %p107 = scmp.eq.s32.totalorder %s20, 14
      %p108 = scmp.ne.s32.totalorder %s103, %s105
      %p109 = scmp.eq.s32.totalorder %s20, 0
      %p110 = por %p108, %p109
      %p111 = scmp.ne.s32.totalorder %s103, %s105
      %p112 = scmp.eq.s32.totalorder %s25, 14
      %p113 = por %p111, %p112
      %p114 = scmp.ne.s32.totalorder %s105, %s106
      %p115 = scmp.eq.s32.totalorder %s25, 0
      %p116 = por %p114, %p115
      %p117 = scmp.ne.s32.totalorder %s105, %s106
      %p118 = scmp.eq.s32.totalorder %s26, 14
      %p119 = por %p117, %p118
      %p121 = scmp.ne.s32.totalorder %s106, %s120
      %p122 = scmp.eq.s32.totalorder %s26, 0
      %p123 = por %p121, %p122
      %s125 = sadd.s32 %s124, 1
      %p128 = scmp.eq.s32.totalorder %s20, 14
      %p129 = scmp.ne.s32.totalorder %s124, %s126
      %p130 = scmp.eq.s32.totalorder %s20, 0
      %p131 = por %p129, %p130
      %p132 = scmp.ne.s32.totalorder %s124, %s126
      %p133 = scmp.eq.s32.totalorder %s25, 14
      %p134 = por %p132, %p133
      %p135 = scmp.ne.s32.totalorder %s126, %s127
      %p136 = scmp.eq.s32.totalorder %s25, 0
      %p137 = por %p135, %p136
      %p138 = scmp.ne.s32.totalorder %s126, %s127
      %p139 = scmp.eq.s32.totalorder %s26, 14
      %p140 = por %p138, %p139
      %p142 = scmp.ne.s32.totalorder %s127, %s141
      %p143 = scmp.eq.s32.totalorder %s26, 0
      %p144 = por %p142, %p143
      %s145 = ssub.s32 %s27, %s46
      %s146 = ssub.s32 %s28, %s42
      %s147 = sor.u32 %s145, %s146
      %p148 = scmp.eq.s32.totalorder %s147, 0
      %s150 = sadd.s32 %s149, 1
      %s151 = scalar_select %p148, %s149, %s150
      %p154 = pneg %p148
      %p155 = scmp.eq.s32.totalorder %s20, 14
      %p156 = por %p154, %p155
      %p157 = scmp.ne.s32.totalorder %s149, %s152
      %p158 = scmp.eq.s32.totalorder %s20, 0
      %p159 = por %p157, %p158
      %p160 = scmp.ne.s32.totalorder %s149, %s152
      %p161 = scmp.eq.s32.totalorder %s25, 14
      %p162 = por %p160, %p161
      %p163 = scmp.ne.s32.totalorder %s152, %s153
      %p164 = scmp.eq.s32.totalorder %s25, 0
      %p165 = por %p163, %p164
      %p166 = scmp.ne.s32.totalorder %s152, %s153
      %p167 = scmp.eq.s32.totalorder %s26, 14
      %p168 = por %p166, %p167
      %p170 = scmp.ne.s32.totalorder %s153, %s169
      %p171 = scmp.eq.s32.totalorder %s26, 0
      %p172 = por %p170, %p171
      %p173 = scmp.le.s32.totalorder 1, %s20
      %p174 = scmp.lt.s32.totalorder %s20, 16
      %p175 = pnand %p173, %p174
      %p176 = pneg %p175
      // Predicated region
      $region9: #{tpu_custom_call.1} parent=5 // pred_check
        _
      $region10: #{tpu_custom_call.1} parent=5 // pred_check_branch
        %178 = sbr.rel (%p175) target = $region12
      $region11: #{tpu_custom_call.1} parent=5 // pred_region
        %s179 = ssub.s32 %s20, 1
        // Predicated region
        $region13: #{tpu_custom_call.1} parent=11 // pred_check
          %p180 = pneg %p116
        $region14: #{tpu_custom_call.1} parent=11 // pred_check_branch
          %182 = sbr.rel (%p180) target = $region16
        $region15: #{tpu_custom_call.1} parent=11 // pred_region
          %s184 = ssub.s32 16, 16
          %185 = vsyncadd [#allocation7], %s184
          %s187 = sshll.u32 [#allocation8], 4
          %s188 = int_to_ptr.vmem [resolvable:$true] %s187
          %190 = dma.hbm_to_vmem [thread:$0]  %s2, 16, %s188, [#allocation7]
        $region16: #{tpu_custom_call.1} parent=11 // pred_fallthru
          _
        // Predicated region
        $region17: #{tpu_custom_call.1} parent=11 // pred_check
          %p191 = pneg %p137
        $region18: #{tpu_custom_call.1} parent=11 // pred_check_branch
          %193 = sbr.rel (%p191) target = $region20
        $region19: #{tpu_custom_call.1} parent=11 // pred_region
          %s195 = ssub.s32 16, 16
          %196 = vsyncadd [#allocation10], %s195
          %s198 = sshll.u32 [#allocation9], 4
          %s199 = int_to_ptr.vmem [resolvable:$true] %s198
          %201 = dma.hbm_to_vmem [thread:$0]  %s3, 16, %s199, [#allocation10]
        $region20: #{tpu_custom_call.1} parent=11 // pred_fallthru
          _
      $region12: #{tpu_custom_call.1} parent=5 // pred_fallthru
        _
      %p202 = scmp.lt.s32.totalorder %s20, 15
      // Predicated region
      $region21: #{tpu_custom_call.1} parent=5 // pred_check
        %p203 = pneg %p202
      $region22: #{tpu_custom_call.1} parent=5 // pred_check_branch
        %205 = sbr.rel (%p203) target = $region24
      $region23: #{tpu_custom_call.1} parent=5 // pred_region
        // Predicated region
        $region25: #{tpu_custom_call.1} parent=23 // pred_check
          %p206 = pneg %p63
        $region26: #{tpu_custom_call.1} parent=23 // pred_check_branch
          %208 = sbr.rel (%p206) target = $region28
        $region27: #{tpu_custom_call.1} parent=23 // pred_region
          %s209 = sand.u32 %s53, 1
          %s210 = scalar_lea.sflag [#allocation4], %s209
          %s211 = sand.u32 %s53, 1
          %s212 = smul.addr %s211, 4
          %s213 = scalar_lea.vmem [#allocation3], %s212
          %s214 = sadd.s32 %s28, %s29
          %s216 = ssub.s32 64, 64
          %217 = vsyncadd %s210, %s216
          %s218 = smul.addr %s27, 7
          %s219 = sadd.s32 %s214, %s218
          %s220 = smul.addr %s219, 64
          %s221 = scalar_lea.hbm %s0, %s220
          %s223 = sshll.u32 %s213, 4
          %s224 = int_to_ptr.vmem [resolvable:$true] %s223
          %226 = dma.hbm_to_vmem [thread:$0]  %s221, 64, %s224, %s210
        $region28: #{tpu_custom_call.1} parent=23 // pred_fallthru
          _
        // Predicated region
        $region29: #{tpu_custom_call.1} parent=23 // pred_check
          %p227 = pneg %p89
        $region30: #{tpu_custom_call.1} parent=23 // pred_check_branch
          %229 = sbr.rel (%p227) target = $region32
        $region31: #{tpu_custom_call.1} parent=23 // pred_region
          %s230 = sand.u32 %s20, 1
          %s231 = scalar_lea.sflag [#allocation7], %s230
          %s232 = sand.u32 %s79, 1
          %s233 = smul.addr %s232, 24
          %s234 = scalar_lea.vmem [#allocation6], %s233
          %s236 = ssub.s32 384, 384
          %237 = vsyncadd %s231, %s236
          %s238 = smul.addr %s29, 6
          %s239 = smul.addr %s238, 64
          %s240 = scalar_lea.hbm %s1, %s239
          %s241 = sshll.u32 %s234, 4
          %s242 = int_to_ptr.vmem [resolvable:$true] %s241
          %247 = dma.hbm_to_vmem [thread:$0]  %s240, 384, %s242, %s231, 64, 64, 4
        $region32: #{tpu_custom_call.1} parent=23 // pred_fallthru
          _
      $region24: #{tpu_custom_call.1} parent=5 // pred_fallthru
        _
      %p248 = scmp.le.s32.totalorder 1, %s20
      %p249 = scmp.lt.s32.totalorder %s20, 16
      %p250 = pnand %p248, %p249
      %p251 = pneg %p250
      // Predicated region
      $region33: #{tpu_custom_call.1} parent=5 // pred_check
        _
      $region34: #{tpu_custom_call.1} parent=5 // pred_check_branch
        %253 = sbr.rel (%p250) target = $region36
      $region35: #{tpu_custom_call.1} parent=5 // pred_region
        %s254 = ssub.s32 %s20, 1
        %s255 = sand.u32 %s56, 1
        %s256 = scalar_lea.sflag [#allocation4], %s255
        %s257 = sand.u32 %s56, 1
        %s258 = smul.addr %s257, 4
        %s259 = scalar_lea.vmem [#allocation3], %s258
        // Predicated region
        $region37: #{tpu_custom_call.1} parent=35 // pred_check
          %p260 = pneg %p69
        $region38: #{tpu_custom_call.1} parent=35 // pred_check_branch
          %262 = sbr.rel (%p260) target = $region40
        $region39: #{tpu_custom_call.1} parent=35 // pred_region
          %263 = dma.done %s256, 64
        $region40: #{tpu_custom_call.1} parent=35 // pred_fallthru
          _
        %s264 = sand.u32 %s25, 1
        %s265 = scalar_lea.sflag [#allocation7], %s264
        %s266 = sand.u32 %s82, 1
        %s267 = smul.addr %s266, 24
        %s268 = scalar_lea.vmem [#allocation6], %s267
        // Predicated region
        $region41: #{tpu_custom_call.1} parent=35 // pred_check
          %p269 = pneg %p95
        $region42: #{tpu_custom_call.1} parent=35 // pred_check_branch
          %271 = sbr.rel (%p269) target = $region44
        $region43: #{tpu_custom_call.1} parent=35 // pred_region
          %272 = dma.done %s265, 384
        $region44: #{tpu_custom_call.1} parent=35 // pred_fallthru
          _
        // Predicated region
        $region45: #{tpu_custom_call.1} parent=35 // pred_check
          %p273 = pneg %p116
        $region46: #{tpu_custom_call.1} parent=35 // pred_check_branch
          %275 = sbr.rel (%p273) target = $region48
        $region47: #{tpu_custom_call.1} parent=35 // pred_region
          %276 = dma.done [#allocation7], 16
        $region48: #{tpu_custom_call.1} parent=35 // pred_fallthru
          _
        // Predicated region
        $region49: #{tpu_custom_call.1} parent=35 // pred_check
          %p277 = pneg %p137
        $region50: #{tpu_custom_call.1} parent=35 // pred_check_branch
          %279 = sbr.rel (%p277) target = $region52
        $region51: #{tpu_custom_call.1} parent=35 // pred_region
          %280 = dma.done [#allocation10], 16
        $region52: #{tpu_custom_call.1} parent=35 // pred_fallthru
          _
        %s281 = sand.u32 %s56, 1
        %s282 = scalar_lea.sflag [#allocation4], %s281
        %s283 = sand.u32 %s56, 1
        %s284 = smul.addr %s283, 4
        %s285 = scalar_lea.vmem [#allocation3], %s284
        %p286 = pneg %p69
        %p287 = pneg %p66
        %s288 = sand.u32 %s25, 1
        %s289 = scalar_lea.sflag [#allocation7], %s288
        %s290 = sand.u32 %s82, 1
        %s291 = smul.addr %s290, 24
        %s292 = scalar_lea.vmem [#allocation6], %s291
        %p293 = pneg %p95
        %p294 = pneg %p92
        %p295 = pneg %p116
        %p296 = pneg %p113
        %p297 = pneg %p137
        %p298 = pneg %p134
        %p299 = pneg %p165
        %p300 = pneg %p162
        %s301 = sand.u32 %s152, 1
        %s302 = scalar_lea.sflag [#allocation5], %s301
        %s303 = sand.u32 %s152, 1
        %s304 = smul.addr %s303, 4
        %s305 = scalar_lea.vmem [#allocation11], %s304
        %s306 = sadd.s32 %s31, %s32
        %p308 = scmp.eq.s32.totalorder %s32, 0
        // Predicated region
        $region53: #{tpu_custom_call.1} parent=35 // pred_check
          %p309 = pneg %p308
        $region54: #{tpu_custom_call.1} parent=35 // pred_check_branch
          %311 = sbr.rel (%p309) target = $region56
        $region55: #{tpu_custom_call.1} parent=35 // pred_region
          %vm312 = vcmask 193536
          %313 = vst.msk [vmem:[#allocation2] sm:$0x3f] %vm312, 0.0
        $region56: #{tpu_custom_call.1} parent=35 // pred_fallthru
          _
        %v314 = vld [vmem:[%s259] sm:$0x7]
        %v315 = vld [vmem:[%s268] sm:$0xf]
        %v316 = vld [vmem:[%s268 + $0x4] sm:$0xf]
        %v317 = vld [vmem:[#allocation2] sm:$0x3f]
        %v320 = vunpack.c.l.b16 %v315
        %v321 = vunpack.c.l.b16 %v316
        %v322 = vpack.c.b16 %v321, %v320
        %vm324 = vcmask 130048
        %v326 = vsel %vm324, %v314, 0
        %328 = vmatprep.subr.bf16.mxu0 0
        %329 = vmatpush1.bf16.msra.mxu0 %v322
        %330 = vmatprep.subr.bf16.mxu0 0
        %331 = vmatpush1.bf16.msra.mxu0 0
        %332 = vmatprep.subr.bf16.mxu0 0
        %333 = vmatpush1.bf16.msra.mxu0 0
        %334 = vmatprep.subr.bf16.mxu0 0
        %335 = vmatpush1.bf16.msra.mxu0 0
        %336 = vmatprep.subr.bf16.mxu0 0
        %337 = vmatpush1.bf16.msra.mxu0 0
        %338 = vmatprep.subr.bf16.mxu0 0
        %339 = vmatpush1.bf16.msra.mxu0 0
        %340 = vmatprep.subr.bf16.mxu0 0
        %341 = vmatpush1.bf16.msra.mxu0 0
        %342 = vmatprep.subr.bf16.mxu0 0
        %343 = vmatpush1.bf16.msra.mxu0 0
        %344 = vmatprep.subr.bf16.mxu0 0
        %345 = vmatpush1.bf16.msra.mxu0 0
        %346 = vmatprep.subr.bf16.mxu0 0
        %347 = vmatpush1.bf16.msra.mxu0 0
        %348 = vmatprep.subr.bf16.mxu0 0
        %349 = vmatpush1.bf16.msra.mxu0 0
        %350 = vmatprep.subr.bf16.mxu0 0
        %351 = vmatpush1.bf16.msra.mxu0 0
        %352 = vmatprep.subr.bf16.mxu0 0
        %353 = vmatpush1.bf16.msra.mxu0 0
        %354 = vmatprep.subr.bf16.mxu0 0
        %355 = vmatpush1.bf16.msra.mxu0 0
        %356 = vmatprep.subr.bf16.mxu0 0
        %357 = vmatpush1.bf16.msra.mxu0 0
        %358 = vmatprep.subr.bf16.mxu0 0
        %359 = vmatpush1.bf16.msra.mxu0 0
        %360 = vmatprep.mubr.bf16.mxu0 0
        %361 = vmatmul.mubr.bf16.gmra.mrb[0].mxu0 %v326
        %v362 = vpop.f32.mrb[0].mxu0
        %v363 = vadd.f32 0.0, %v362
        %v364 = vpop.f32.mrb[0].mxu0
        %v365 = vpop.f32.mrb[0].mxu0
        %v366 = vpop.f32.mrb[0].mxu0
        %367 = vdwg.mxu0
        %v368 = vadd.f32 %v317, %v363
        %vm369 = vcmask 193536
        %370 = vst.msk [vmem:[#allocation2] sm:$0x3f] %vm369, %v368
        %v371 = vld [vmem:[%s259] sm:$0xf]
        %v372 = vld [vmem:[%s268 + $0x8] sm:$0xf]
        %v373 = vld [vmem:[%s268 + $0xc] sm:$0xf]
        %v374 = vld [vmem:[#allocation2] sm:$0x3f]
        %v376 = vunpack.c.l.b16 %v371
        %v377 = vpack.c.b16 %v376, %v376
        %v379 = vshrl.u32 %v377, 16
        %v381 = vshll.u32 %v377, 16
        %v383 = vrot.slane %v381, 1
        %v384 = vor.u32 %v379, %v383
        %v387 = vunpack.c.l.b16 %v372
        %v388 = vunpack.c.l.b16 %v373
        %v389 = vpack.c.b16 %v388, %v387
        %v392 = vsel %vm324, %v384, 0
        %394 = vmatprep.subr.bf16.mxu0 0
        %395 = vmatpush1.bf16.msra.mxu0 %v389
        %396 = vmatprep.subr.bf16.mxu0 0
        %397 = vmatpush1.bf16.msra.mxu0 0
        %398 = vmatprep.subr.bf16.mxu0 0
        %399 = vmatpush1.bf16.msra.mxu0 0
        %400 = vmatprep.subr.bf16.mxu0 0
        %401 = vmatpush1.bf16.msra.mxu0 0
        %402 = vmatprep.subr.bf16.mxu0 0
        %403 = vmatpush1.bf16.msra.mxu0 0
        %404 = vmatprep.subr.bf16.mxu0 0
        %405 = vmatpush1.bf16.msra.mxu0 0
        %406 = vmatprep.subr.bf16.mxu0 0
        %407 = vmatpush1.bf16.msra.mxu0 0
        %408 = vmatprep.subr.bf16.mxu0 0
        %409 = vmatpush1.bf16.msra.mxu0 0
        %410 = vmatprep.subr.bf16.mxu0 0
        %411 = vmatpush1.bf16.msra.mxu0 0
        %412 = vmatprep.subr.bf16.mxu0 0
        %413 = vmatpush1.bf16.msra.mxu0 0
        %414 = vmatprep.subr.bf16.mxu0 0
        %415 = vmatpush1.bf16.msra.mxu0 0
        %416 = vmatprep.subr.bf16.mxu0 0
        %417 = vmatpush1.bf16.msra.mxu0 0
        %418 = vmatprep.subr.bf16.mxu0 0
        %419 = vmatpush1.bf16.msra.mxu0 0
        %420 = vmatprep.subr.bf16.mxu0 0
        %421 = vmatpush1.bf16.msra.mxu0 0
        %422 = vmatprep.subr.bf16.mxu0 0
        %423 = vmatpush1.bf16.msra.mxu0 0
        %424 = vmatprep.subr.bf16.mxu0 0
        %425 = vmatpush1.bf16.msra.mxu0 0
        %426 = vmatprep.mubr.bf16.mxu0 0
        %427 = vmatmul.mubr.bf16.gmra.mrb[0].mxu0 %v392
        %v428 = vpop.f32.mrb[0].mxu0
        %v429 = vadd.f32 0.0, %v428
        %v430 = vpop.f32.mrb[0].mxu0
        %v431 = vpop.f32.mrb[0].mxu0
        %v432 = vpop.f32.mrb[0].mxu0
        %433 = vdwg.mxu0
        %v434 = vadd.f32 %v374, %v429
        %435 = vst.msk [vmem:[#allocation2] sm:$0x3f] %vm369, %v434
        %v436 = vld [vmem:[%s259] sm:$0xe]
        %v437 = vld [vmem:[%s268 + $0x10] sm:$0xf]
        %v438 = vld [vmem:[%s268 + $0x14] sm:$0xf]
        %v439 = vld [vmem:[#allocation2] sm:$0x3f]
        %v441 = vunpack.c.l.b16 %v436
        %v442 = vpack.c.b16 %v441, %v441
        %v443 = vrot.slane %v442, 1
        %v446 = vunpack.c.l.b16 %v437
        %v447 = vunpack.c.l.b16 %v438
        %v448 = vpack.c.b16 %v447, %v446
        %v451 = vsel %vm324, %v443, 0
        %453 = vmatprep.subr.bf16.mxu0 0
        %454 = vmatpush1.bf16.msra.mxu0 %v448
        %455 = vmatprep.subr.bf16.mxu0 0
        %456 = vmatpush1.bf16.msra.mxu0 0
        %457 = vmatprep.subr.bf16.mxu0 0
        %458 = vmatpush1.bf16.msra.mxu0 0
        %459 = vmatprep.subr.bf16.mxu0 0
        %460 = vmatpush1.bf16.msra.mxu0 0
        %461 = vmatprep.subr.bf16.mxu0 0
        %462 = vmatpush1.bf16.msra.mxu0 0
        %463 = vmatprep.subr.bf16.mxu0 0
        %464 = vmatpush1.bf16.msra.mxu0 0
        %465 = vmatprep.subr.bf16.mxu0 0
        %466 = vmatpush1.bf16.msra.mxu0 0
        %467 = vmatprep.subr.bf16.mxu0 0
        %468 = vmatpush1.bf16.msra.mxu0 0
        %469 = vmatprep.subr.bf16.mxu0 0
        %470 = vmatpush1.bf16.msra.mxu0 0
        %471 = vmatprep.subr.bf16.mxu0 0
        %472 = vmatpush1.bf16.msra.mxu0 0
        %473 = vmatprep.subr.bf16.mxu0 0
        %474 = vmatpush1.bf16.msra.mxu0 0
        %475 = vmatprep.subr.bf16.mxu0 0
        %476 = vmatpush1.bf16.msra.mxu0 0
        %477 = vmatprep.subr.bf16.mxu0 0
        %478 = vmatpush1.bf16.msra.mxu0 0
        %479 = vmatprep.subr.bf16.mxu0 0
        %480 = vmatpush1.bf16.msra.mxu0 0
        %481 = vmatprep.subr.bf16.mxu0 0
        %482 = vmatpush1.bf16.msra.mxu0 0
        %483 = vmatprep.subr.bf16.mxu0 0
        %484 = vmatpush1.bf16.msra.mxu0 0
        %485 = vmatprep.mubr.bf16.mxu0 0
        %486 = vmatmul.mubr.bf16.gmra.mrb[0].mxu0 %v451
        %v487 = vpop.f32.mrb[0].mxu0
        %v488 = vadd.f32 0.0, %v487
        %v489 = vpop.f32.mrb[0].mxu0
        %v490 = vpop.f32.mrb[0].mxu0
        %v491 = vpop.f32.mrb[0].mxu0
        %492 = vdwg.mxu0
        %v493 = vadd.f32 %v439, %v488
        %494 = vst.msk [vmem:[#allocation2] sm:$0x3f] %vm369, %v493
        %p495 = scmp.eq.s32.totalorder %s32, 2
        // Predicated region
        $region57: #{tpu_custom_call.1} parent=35 // pred_check
          %p496 = pneg %p495
        $region58: #{tpu_custom_call.1} parent=35 // pred_check_branch
          %498 = sbr.rel (%p496) target = $region60
        $region59: #{tpu_custom_call.1} parent=35 // pred_region
          %v499 = vld [vmem:[#allocation2] sm:$0x3f]
          %v500 = vld [vmem:[#allocation8] sm:$0x1]
          %v502 = vlaneseq
          %v503 = vshrl.u32 %v502, 7
          %v504 = vsub.s32 0, %v503
          %v505 = vrot.slane %v500, %v504
          %v507 = vmul.f32 %v499, %v505
          %v508 = vld [vmem:[#allocation9] sm:$0x1]
          %v510 = vlaneseq
          %v511 = vshrl.u32 %v510, 7
          %v512 = vsub.s32 0, %v511
          %v513 = vrot.slane %v508, %v512
          %v515 = vadd.f32 %v507, %v513
          %v516 = vmax.f32 %v515, 0.0
          %v517 = vpack.c.bf16 %v516, %v516
          %vm518 = vcmask 190464
          %519 = vst.msk [vmem:[%s305] sm:$0x7] %vm518, %v517
        $region60: #{tpu_custom_call.1} parent=35 // pred_fallthru
          _
        %s520 = sand.u32 %s152, 1
        %s521 = scalar_lea.sflag [#allocation5], %s520
        %s522 = sand.u32 %s152, 1
        %s523 = smul.addr %s522, 4
        %s524 = scalar_lea.vmem [#allocation11], %s523
        // Predicated region
        $region61: #{tpu_custom_call.1} parent=35 // pred_check
          %p525 = pneg %p162
        $region62: #{tpu_custom_call.1} parent=35 // pred_check_branch
          %527 = sbr.rel (%p525) target = $region64
        $region63: #{tpu_custom_call.1} parent=35 // pred_region
          %s529 = ssub.s32 64, 64
          %530 = vsyncadd %s521, %s529
          %s531 = smul.addr %s30, 5
          %s532 = sadd.s32 %s31, %s531
          %s533 = smul.addr %s532, 64
          %s534 = scalar_lea.hbm %s4, %s533
          %s536 = sshll.u32 %s524, 4
          %s537 = int_to_ptr.vmem [resolvable:$true] %s536
          %539 = dma.vmem_to_hbm [thread:$0]  %s537, 64, %s534, %s521
        $region64: #{tpu_custom_call.1} parent=35 // pred_fallthru
          _
      $region36: #{tpu_custom_call.1} parent=5 // pred_fallthru
        _
      %p540 = scmp.le.s32.totalorder 2, %s20
      // Predicated region
      $region65: #{tpu_custom_call.1} parent=5 // pred_check
        %p541 = pneg %p540
      $region66: #{tpu_custom_call.1} parent=5 // pred_check_branch
        %543 = sbr.rel (%p541) target = $region68
      $region67: #{tpu_custom_call.1} parent=5 // pred_region
        %s544 = ssub.s32 %s20, 2
        // Predicated region
        $region69: #{tpu_custom_call.1} parent=67 // pred_check
          %p545 = pneg %p168
        $region70: #{tpu_custom_call.1} parent=67 // pred_check_branch
          %547 = sbr.rel (%p545) target = $region72
        $region71: #{tpu_custom_call.1} parent=67 // pred_region
          %s548 = sand.u32 %s153, 1
          %s549 = scalar_lea.sflag [#allocation5], %s548
          %s550 = sand.u32 %s153, 1
          %s551 = smul.addr %s550, 4
          %s552 = scalar_lea.vmem [#allocation11], %s551
          %553 = dma.done %s549, 64
        $region72: #{tpu_custom_call.1} parent=67 // pred_fallthru
          _
      $region68: #{tpu_custom_call.1} parent=5 // pred_fallthru
        _
    $region6: #{tpu_custom_call.1} parent=1 // loop_footer
      %s24 = sadd.s32 1, %s20
    $region7: #{tpu_custom_call.1} parent=1 // loop_footer_branch
      %19 = sbr.rel target = $region3
    $region8: #{tpu_custom_call.1} parent=1 // loop_exit
      _
    %554 = vsyncpa [#allocation4], 1
    %s555 = scalar_lea.sflag [#allocation4], 1
    %556 = vsyncpa %s555, 1
    %557 = vsyncpa [#allocation7], 1
    %s558 = scalar_lea.sflag [#allocation7], 1
    %559 = vsyncpa %s558, 1
    %560 = vsyncpa [#allocation10], 1
    %561 = vsyncpa [#allocation5], 1
    %s562 = scalar_lea.sflag [#allocation5], 1
    %563 = vsyncpa %s562, 1

</llo_original>
